<compile_context>
chip_gen: v7x
topology: tpu7x:2x2x1
jax: 0.10.0
libtpu: 0.0.40
codegen_flags: <defaults>
</compile_context>

<pallas_src>
import functools
import math

import jax
import jax.numpy as jnp
from jax import lax
from jax.experimental import pallas as pl
from jax.experimental.pallas import tpu as pltpu


ACT_DTYPE = jnp.bfloat16     # activation / weight storage dtype (HBM traffic)
WGT_DTYPE = jnp.bfloat16


def _detect_vmem_limit():
    """~7/8 of physical VMEM, capped at 112 MiB; safe fallback = 56 MiB (v7x)."""
    cap = None
    try:
        info = pltpu.get_tpu_info()
        cap = getattr(info, "vmem_capacity_bytes", None)
    except Exception:
        cap = None
    if not cap:
        cap = 64 * 1024 * 1024            # conservative: v7x physical VMEM
    return int(min(cap * 7 // 8, 112 * 1024 * 1024))


VMEM_LIMIT = _detect_vmem_limit()


# ---------------------------------------------------------------------------
# tile helpers
# ---------------------------------------------------------------------------
def _round_up(x, m):
    return ((x + m - 1) // m) * m


def _row_tiling(M, target=512):
    """Row (sublane) tile: multiple of 16 (bf16 packing).  Returns (tm, Mp)
    where Mp is M padded up to a tm multiple (no full-M fallback blocks)."""
    tm = min(target, _round_up(M, 16))
    return tm, _round_up(M, tm)


def _tile_lanes(dim, target=512):
    """Lane tile: prefer multiples of 256 (v6e/v7x MXU), else 128, else full."""
    if dim <= target:
        return dim
    for t in range(target, 255, -256):
        if dim % t == 0:
            return t
    t = (target // 128) * 128
    while t >= 128:
        if dim % t == 0:
            return t
        t -= 128
    return dim


def _cparams(sems):
    return pltpu.CompilerParams(dimension_semantics=sems,
                                vmem_limit_bytes=VMEM_LIMIT)


# ---------------------------------------------------------------------------
# exact GELU (erf) via polynomial — matches HF XLM-R (gelu, not gelu_tanh)
# ---------------------------------------------------------------------------
def _erf_f32(x):
    # Abramowitz & Stegun 7.1.26, |err| < 1.5e-7 — below bf16 resolution.
    a1, a2, a3, a4, a5 = (0.254829592, -0.284496736, 1.421413741,
                          -1.453152027, 1.061405429)
    p = 0.3275911
    ax = jnp.abs(x)
    t = 1.0 / (1.0 + p * ax)
    poly = ((((a5 * t + a4) * t + a3) * t + a2) * t + a1) * t
    y = 1.0 - poly * jnp.exp(-ax * ax)
    return jnp.where(x >= 0, y, -y)


def _gelu_exact(x):
    return x * 0.5 * (1.0 + _erf_f32(x * 0.7071067811865476))


# ---------------------------------------------------------------------------
# tiled matmul + bias (K-reduction grid, f32 accumulator)
# ---------------------------------------------------------------------------
def _matmul_kernel(x_ref, w_ref, b_ref, o_ref, acc_ref):
    @pl.when(pl.program_id(2) == 0)
    def _():
        acc_ref[...] = jnp.zeros_like(acc_ref)

    acc_ref[...] += jnp.dot(x_ref[...], w_ref[...],
                            preferred_element_type=jnp.float32)

    @pl.when(pl.program_id(2) == pl.num_programs(2) - 1)
    def _():
        o_ref[...] = (acc_ref[...] + b_ref[...]).astype(o_ref.dtype)


def matmul_bias(x, w, b, out_dtype=None):
    M, K = x.shape
    N = w.shape[1]
    out_dtype = ACT_DTYPE if out_dtype is None else out_dtype
    tm, Mp = _row_tiling(M)
    if Mp != M:
        x = jnp.pad(x, ((0, Mp - M), (0, 0)))
    tn, tk = _tile_lanes(N), _tile_lanes(K)
    grid = (Mp // tm, N // tn, K // tk)
    b2 = b.reshape(1, N).astype(jnp.float32)
    out = pl.pallas_call(
        _matmul_kernel,
        grid=grid,
        in_specs=[pl.BlockSpec((tm, tk), lambda i, j, k: (i, k)),
                  pl.BlockSpec((tk, tn), lambda i, j, k: (k, j)),
                  pl.BlockSpec((1, tn), lambda i, j, k: (0, j))],
        out_specs=pl.BlockSpec((tm, tn), lambda i, j, k: (i, j)),
        out_shape=jax.ShapeDtypeStruct((Mp, N), out_dtype),
        scratch_shapes=[pltpu.VMEM((tm, tn), jnp.float32)],
        compiler_params=_cparams(("parallel", "parallel", "arbitrary")),
    )(x, w, b2)
    return out[:M] if Mp != M else out


def linear_head(x, w, b):
    """Classifier head: pad N up to a multiple of 128 (lane-dense stores)."""
    N = w.shape[1]
    Np = _round_up(N, 128)
    if Np != N:
        w = jnp.pad(w, ((0, 0), (0, Np - N)))
        b = jnp.pad(b, (0, Np - N))
    y = matmul_bias(x, w, b, out_dtype=jnp.float32)
    return y[:, :N]


# ---------------------------------------------------------------------------
# linear + residual + layernorm (attention output projection epilogue)
# ---------------------------------------------------------------------------
def _linear_res_ln_kernel(x_ref, res_ref, w_ref, b_ref, g_ref, bb_ref, o_ref,
                          *, eps):
    y = jnp.dot(x_ref[...], w_ref[...], preferred_element_type=jnp.float32)
    y = y + b_ref[...] + res_ref[...].astype(jnp.float32)
    mu = jnp.mean(y, axis=-1, keepdims=True)
    yc = y - mu
    var = jnp.mean(yc * yc, axis=-1, keepdims=True)
    o_ref[...] = (yc * lax.rsqrt(var + eps) * g_ref[...] + bb_ref[...]
                  ).astype(o_ref.dtype)


def linear_residual_layernorm(x, res, w, b, g, bln, eps):
    M, K = x.shape
    N = w.shape[1]
    tm, Mp = _row_tiling(M)
    if Mp != M:
        x = jnp.pad(x, ((0, Mp - M), (0, 0)))
        res = jnp.pad(res, ((0, Mp - M), (0, 0)))
    f32 = jnp.float32
    out = pl.pallas_call(
        functools.partial(_linear_res_ln_kernel, eps=eps),
        grid=(Mp // tm,),
        in_specs=[pl.BlockSpec((tm, K), lambda i: (i, 0)),
                  pl.BlockSpec((tm, N), lambda i: (i, 0)),
                  pl.BlockSpec((K, N), lambda i: (0, 0)),
                  pl.BlockSpec((1, N), lambda i: (0, 0)),
                  pl.BlockSpec((1, N), lambda i: (0, 0)),
                  pl.BlockSpec((1, N), lambda i: (0, 0))],
        out_specs=pl.BlockSpec((tm, N), lambda i: (i, 0)),
        out_shape=jax.ShapeDtypeStruct((Mp, N), ACT_DTYPE),
        compiler_params=_cparams(("parallel",)),
    )(x, res, w, b.reshape(1, N).astype(f32),
      g.reshape(1, N).astype(f32), bln.reshape(1, N).astype(f32))
    return out[:M] if Mp != M else out


# ---------------------------------------------------------------------------
# fused FFN, tiled over I: LN(gelu(x@W1+b1) @ W2 + b2 + x)
# The (tm, ti) GELU intermediate never touches HBM; W1/W2 streamed in chunks.
# ---------------------------------------------------------------------------
def _ffn_kernel(x_ref, w1_ref, b1_ref, w2_ref, b2_ref, g_ref, bb_ref, o_ref,
                acc_ref, *, eps):
    j = pl.program_id(1)

    @pl.when(j == 0)
    def _():
        acc_ref[...] = jnp.zeros_like(acc_ref)

    x = x_ref[...]
    h = jnp.dot(x, w1_ref[...], preferred_element_type=jnp.float32) + b1_ref[...]
    h = _gelu_exact(h)
    acc_ref[...] += jnp.dot(h.astype(w2_ref.dtype), w2_ref[...],
                            preferred_element_type=jnp.float32)

    @pl.when(j == pl.num_programs(1) - 1)
    def _():
        y = acc_ref[...] + b2_ref[...] + x.astype(jnp.float32)
        mu = jnp.mean(y, axis=-1, keepdims=True)
        yc = y - mu
        var = jnp.mean(yc * yc, axis=-1, keepdims=True)
        o_ref[...] = (yc * lax.rsqrt(var + eps) * g_ref[...] + bb_ref[...]
                      ).astype(o_ref.dtype)


def ffn_layernorm(x, w1, b1, w2, b2, g, bln, eps):
    M, H = x.shape
    I = w1.shape[1]
    tm, Mp = _row_tiling(M)
    ti = _tile_lanes(I)
    if Mp != M:
        x = jnp.pad(x, ((0, Mp - M), (0, 0)))
    f32 = jnp.float32
    out = pl.pallas_call(
        functools.partial(_ffn_kernel, eps=eps),
        grid=(Mp // tm, I // ti),
        in_specs=[pl.BlockSpec((tm, H), lambda i, j: (i, 0)),
                  pl.BlockSpec((H, ti), lambda i, j: (0, j)),
                  pl.BlockSpec((1, ti), lambda i, j: (0, j)),
                  pl.BlockSpec((ti, H), lambda i, j: (j, 0)),
                  pl.BlockSpec((1, H), lambda i, j: (0, 0)),
                  pl.BlockSpec((1, H), lambda i, j: (0, 0)),
                  pl.BlockSpec((1, H), lambda i, j: (0, 0))],
        out_specs=pl.BlockSpec((tm, H), lambda i, j: (i, 0)),
        out_shape=jax.ShapeDtypeStruct((Mp, H), ACT_DTYPE),
        scratch_shapes=[pltpu.VMEM((tm, H), jnp.float32)],
        compiler_params=_cparams(("parallel", "arbitrary")),
    )(x, w1, b1.reshape(1, I).astype(f32), w2, b2.reshape(1, H).astype(f32),
      g.reshape(1, H).astype(f32), bln.reshape(1, H).astype(f32))
    return out[:M] if Mp != M else out


# ---------------------------------------------------------------------------
# standalone layernorm (embeddings), tiled over rows
# ---------------------------------------------------------------------------
def _layernorm_kernel(x_ref, g_ref, b_ref, o_ref, *, eps):
    x = x_ref[...].astype(jnp.float32)
    mu = jnp.mean(x, axis=-1, keepdims=True)
    xc = x - mu
    var = jnp.mean(xc * xc, axis=-1, keepdims=True)
    o_ref[...] = (xc * lax.rsqrt(var + eps) * g_ref[...] + b_ref[...]
                  ).astype(o_ref.dtype)


def layernorm(x, g, b, eps):
    M, H = x.shape
    tm, Mp = _row_tiling(M)
    if Mp != M:
        x = jnp.pad(x, ((0, Mp - M), (0, 0)))
    f32 = jnp.float32
    out = pl.pallas_call(
        functools.partial(_layernorm_kernel, eps=eps),
        grid=(Mp // tm,),
        in_specs=[pl.BlockSpec((tm, H), lambda i: (i, 0)),
                  pl.BlockSpec((1, H), lambda i: (0, 0)),
                  pl.BlockSpec((1, H), lambda i: (0, 0))],
        out_specs=pl.BlockSpec((tm, H), lambda i: (i, 0)),
        out_shape=jax.ShapeDtypeStruct((Mp, H), ACT_DTYPE),
        compiler_params=_cparams(("parallel",)),
    )(x, g.reshape(1, H).astype(f32), b.reshape(1, H).astype(f32))
    return out[:M] if Mp != M else out


# ---------------------------------------------------------------------------
# attention: one grid step per batch, head-major layout (leading-axis heads)
# ---------------------------------------------------------------------------
def _attention_kernel(qkv_ref, m_ref, o_ref, *, num_heads, scale):
    _, _, S, _ = qkv_ref.shape
    qkv = qkv_ref[...]                               # (3, nH, S, Dh)
    # mask broadcast hoisted out of the head loop (no CSE for broadcast_in_dim)
    m_b = jnp.broadcast_to(m_ref[...].astype(jnp.float32), (S, S))
    for h in range(num_heads):
        qh, kh, vh = qkv[0, h], qkv[1, h], qkv[2, h]          # (S, Dh) each
        # q @ k^T without an in-kernel transpose: contract last dims of both
        s = lax.dot_general(qh, kh, (((1,), (1,)), ((), ())),
                            preferred_element_type=jnp.float32) * scale + m_b
        s = s - jnp.max(s, axis=-1, keepdims=True)
        p = jnp.exp(s)
        p = p * pl.reciprocal(jnp.sum(p, axis=-1, keepdims=True), approx=True)
        o_ref[h] = jnp.dot(p.astype(vh.dtype), vh,
                           preferred_element_type=jnp.float32).astype(o_ref.dtype)


def attention(qkv, B, S, H, num_heads, mask_add):
    Dh = H // num_heads
    scale = 1.0 / math.sqrt(Dh)
    # head-major: head selection in-kernel becomes a leading-axis index
    qkv5 = qkv.reshape(B, S, 3, num_heads, Dh).transpose(0, 2, 3, 1, 4)
    out = pl.pallas_call(
        functools.partial(_attention_kernel, num_heads=num_heads, scale=scale),
        grid=(B,),
        in_specs=[pl.BlockSpec((None, 3, num_heads, S, Dh),
                               lambda b: (b, 0, 0, 0, 0)),
                  pl.BlockSpec((None, 1, S), lambda b: (b, 0, 0))],
        out_specs=pl.BlockSpec((None, num_heads, S, Dh), lambda b: (b, 0, 0, 0)),
        out_shape=jax.ShapeDtypeStruct((B, num_heads, S, Dh), ACT_DTYPE),
        compiler_params=_cparams(("parallel",)),
    )(qkv5, mask_add)
    return out.transpose(0, 2, 1, 3).reshape(B * S, H)   # (B*S, H)


# ---------------------------------------------------------------------------
# BiLSTM: recurrent part only; fwd/bwd interleaved, one fused matmul per step
# ---------------------------------------------------------------------------
def _bilstm_kernel(xz_ref, whh_ref, of_ref, ob_ref, *, unroll):
    # xz_ref: (S, 2, B, 4Hc) precomputed x@W_ih + b; dir 0 = fwd@t, 1 = bwd@S-1-t
    # whh_ref: (2, Hc, 4Hc) per-direction recurrent weights (gates along lanes)
    S, _, B, G = xz_ref.shape
    Hc = G // 4
    whh = whh_ref[...]                               # hoisted out of the loop

    def body(t, carry):
        h, c = carry                                 # (2, B, Hc) f32
        z = xz_ref[t].astype(jnp.float32)            # (2, B, 4Hc)
        z = z + lax.dot_general(h.astype(whh.dtype), whh,
                                (((2,), (1,)), ((0,), (0,))),
                                preferred_element_type=jnp.float32)
        ig = jax.nn.sigmoid(z[..., 0 * Hc:1 * Hc])
        fg = jax.nn.sigmoid(z[..., 1 * Hc:2 * Hc])
        gg = jnp.tanh(z[..., 2 * Hc:3 * Hc])
        og = jax.nn.sigmoid(z[..., 3 * Hc:4 * Hc])
        c_new = fg * c + ig * gg
        h_new = og * jnp.tanh(c_new)
        of_ref[t] = h_new[0].astype(of_ref.dtype)
        ob_ref[S - 1 - t] = h_new[1].astype(ob_ref.dtype)
        return h_new, c_new

    h0 = jnp.zeros((2, B, Hc), jnp.float32)
    c0 = jnp.zeros((2, B, Hc), jnp.float32)
    lax.fori_loop(0, S, body, (h0, c0), unroll=unroll)


def bilstm(seq, p):
    B, S, H = seq.shape
    Hc = H // 2
    x2 = seq.reshape(B * S, H)

    # hoisted input projections (PyTorch b_ih + b_hh folded in)
    xz_f = matmul_bias(x2, p["w_ih_f"], p["b_ih_f"] + p["b_hh_f"])   # (B*S, 4Hc)
    xz_b = matmul_bias(x2, p["w_ih_b"], p["b_ih_b"] + p["b_hh_b"])

    xz_f = xz_f.reshape(B, S, 4 * Hc).transpose(1, 0, 2)             # (S, B, 4Hc)
    xz_b = xz_b.reshape(B, S, 4 * Hc)[:, ::-1, :].transpose(1, 0, 2)  # time-reversed
    xz = jnp.stack([xz_f, xz_b], axis=1)                             # (S, 2, B, 4Hc)
    whh = jnp.stack([p["w_hh_f"], p["w_hh_b"]], axis=0)              # (2, Hc, 4Hc)

    unroll = S if S <= 32 else 4     # partial unroll for realistic sequences
    out_f, out_b = pl.pallas_call(
        functools.partial(_bilstm_kernel, unroll=unroll),
        grid=(1,),
        in_specs=[pl.BlockSpec((S, 2, B, 4 * Hc), lambda i: (0, 0, 0, 0)),
                  pl.BlockSpec((2, Hc, 4 * Hc), lambda i: (0, 0, 0))],
        out_specs=[pl.BlockSpec((S, B, Hc), lambda i: (0, 0, 0)),
                   pl.BlockSpec((S, B, Hc), lambda i: (0, 0, 0))],
        out_shape=[jax.ShapeDtypeStruct((S, B, Hc), ACT_DTYPE),
                   jax.ShapeDtypeStruct((S, B, Hc), ACT_DTYPE)],
        compiler_params=_cparams(("arbitrary",)),
    )(xz, whh)
    # forward half first, backward second (matches nn.LSTM bidirectional output)
    return jnp.concatenate([out_f, out_b], axis=-1).transpose(1, 0, 2)  # (B,S,H)


# ---------------------------------------------------------------------------
# model
# ---------------------------------------------------------------------------
def transformer_layer(p, h2, B, S, mask_add, cfg):
    H = h2.shape[1]
    nH = cfg["num_attention_heads"]
    eps = cfg["layer_norm_eps"]
    qkv = matmul_bias(h2, p["qkv_w"], p["qkv_b"])          # (B*S, 3H) fused QKV
    ctx = attention(qkv, B, S, H, nH, mask_add)            # (B*S, H)
    h1 = linear_residual_layernorm(ctx, h2, p["o_w"], p["o_b"],
                                   p["ln1_g"], p["ln1_b"], eps)
    return ffn_layernorm(h1, p["i_w"], p["i_b"], p["o2_w"], p["o2_b"],
                         p["ln2_g"], p["ln2_b"], eps)


def xlmr_encoder(params, input_ids, attention_mask, cfg):
    pad = cfg["pad_token_id"]
    B, S = input_ids.shape
    H = cfg["hidden_size"]

    # XLM-R position ids: cumsum of non-pad mask, offset by padding_idx
    not_pad = (input_ids != pad).astype(jnp.int32)
    pos_ids = jnp.cumsum(not_pad, axis=1) * not_pad + pad

    emb = (jnp.take(params["word_emb"], input_ids, axis=0)
           + jnp.take(params["pos_emb"], pos_ids, axis=0)
           + params["type_emb"][0][None, None, :])
    h = layernorm(emb.reshape(B * S, H).astype(ACT_DTYPE),
                  params["emb_ln_g"], params["emb_ln_b"], cfg["layer_norm_eps"])
    # embedding dropout: identity at inference

    mask_add = ((1.0 - attention_mask.astype(jnp.float32)) * -1e9)[:, None, :]
    for lp in params["layers"]:
        h = transformer_layer(lp, h, B, S, mask_add, cfg)
    return h.reshape(B, S, H)


def model_forward(params, input_ids, attention_mask, cfg):
    B, S = input_ids.shape
    H = cfg["hidden_size"]
    seq = xlmr_encoder(params, input_ids, attention_mask, cfg)   # (B, S, H)
    # nn.Dropout(hidden_dropout_prob): identity at inference

    # Intent head: (B, H) x (H, num_intent) is microseconds of MXU work —
    # a plain XLA dot beats a pallas_call launch here (per perf review).
    cls_tok = seq[:, 0, :].astype(jnp.float32)
    intent_logits = (cls_tok @ params["intent_w"].astype(jnp.float32)
                     + params["intent_b"])

    lstm_out = bilstm(seq, params["lstm"])                       # (B, S, H)
    ns = params["slot_w"].shape[1]
    slot_flat = linear_head(lstm_out.reshape(B * S, H),
                            params["slot_w"], params["slot_b"])  # (B*S, ns)
    slot_logits = slot_flat.reshape(B, S, ns)
    return intent_logits, slot_logits


def _cross_entropy(logits, labels):
    logp = jax.nn.log_softmax(logits.astype(jnp.float32), axis=-1)
    return -jnp.take_along_axis(logp, labels[:, None], axis=-1)[:, 0]


def model_loss(intent_logits, slot_logits, intent_labels, slot_labels):
    intent_loss = jnp.mean(_cross_entropy(intent_logits, intent_labels))
    ns = slot_logits.shape[-1]
    flat_logits = slot_logits.reshape(-1, ns)
    flat_labels = slot_labels.reshape(-1)
    valid = (flat_labels != -100).astype(jnp.float32)
    safe_labels = jnp.where(flat_labels != -100, flat_labels, 0)
    ce = _cross_entropy(flat_logits, safe_labels)
    slot_loss = jnp.sum(ce * valid) / jnp.maximum(jnp.sum(valid), 1.0)
    return intent_loss + 2.0 * slot_loss


# ---------------------------------------------------------------------------
# deterministic parameter init
# ---------------------------------------------------------------------------
def init_params(key, cfg, num_intent, num_slot):
    H = cfg["hidden_size"]
    I = cfg["intermediate_size"]
    Hc = H // 2
    pad = cfg["pad_token_id"]
    keys = iter(jax.random.split(key, 256))

    def nrm(shape, scale=0.02):
        return (scale * jax.random.normal(next(keys), shape)).astype(WGT_DTYPE)

    def zeros(shape):
        return jnp.zeros(shape, jnp.float32)

    def ones(shape):
        return jnp.ones(shape, jnp.float32)

    # nn.Embedding(padding_idx=...) zeroes the padding row — match that
    word_emb = nrm((cfg["vocab_size"], H)).at[pad].set(0)
    pos_emb = nrm((cfg["max_position_embeddings"], H)).at[pad].set(0)

    params = {
        "word_emb": word_emb,
        "pos_emb": pos_emb,
        "type_emb": nrm((cfg["type_vocab_size"], H)),
        "emb_ln_g": ones((H,)), "emb_ln_b": zeros((H,)),
        "layers": [],
        "intent_w": nrm((H, num_intent)), "intent_b": zeros((num_intent,)),
        "slot_w": nrm((H, num_slot)), "slot_b": zeros((num_slot,)),
        "lstm": {
            # gate order [i, f, g, o] along lanes (4*Hc)
            "w_ih_f": nrm((H, 4 * Hc)), "w_hh_f": nrm((Hc, 4 * Hc)),
            "b_ih_f": zeros((4 * Hc,)), "b_hh_f": zeros((4 * Hc,)),
            "w_ih_b": nrm((H, 4 * Hc)), "w_hh_b": nrm((Hc, 4 * Hc)),
            "b_ih_b": zeros((4 * Hc,)), "b_hh_b": zeros((4 * Hc,)),
        },
    }
    for _ in range(cfg["num_hidden_layers"]):
        params["layers"].append({
            # fused QKV weight: columns [q | k | v]
            "qkv_w": nrm((H, 3 * H)), "qkv_b": zeros((3 * H,)),
            "o_w": nrm((H, H)), "o_b": zeros((H,)),
            "ln1_g": ones((H,)), "ln1_b": zeros((H,)),
            "i_w": nrm((H, I)), "i_b": zeros((I,)),
            "o2_w": nrm((I, H)), "o2_b": zeros((H,)),
            "ln2_g": ones((H,)), "ln2_b": zeros((H,)),
        })
    return params


# ---------------------------------------------------------------------------
# main
# ---------------------------------------------------------------------------
if __name__ == "__main__":
    cfg = dict(
        vocab_size=120,
        hidden_size=32,
        num_hidden_layers=2,
        num_attention_heads=2,
        intermediate_size=64,
        max_position_embeddings=40,
        type_vocab_size=1,
        pad_token_id=1,
        layer_norm_eps=1e-5,
        hidden_dropout_prob=0.1,
    )
    num_intent, num_slot = 5, 7
    B, S = 2, 8

    key = jax.random.PRNGKey(0)
    pkey, dkey, lkey = jax.random.split(key, 3)
    params = init_params(pkey, cfg, num_intent, num_slot)

    ids = jax.random.randint(dkey, (B, S), 3, cfg["vocab_size"], dtype=jnp.int32)
    attention_mask = jnp.array([[1] * S, [1] * (S - 2) + [0, 0]], dtype=jnp.int32)
    input_ids = jnp.where(attention_mask == 1, ids, cfg["pad_token_id"])

    intent_logits, slot_logits = model_forward(params, input_ids,
                                               attention_mask, cfg)
    jax.block_until_ready((intent_logits, slot_logits))
    assert intent_logits.shape == (B, num_intent)
    assert slot_logits.shape == (B, S, num_slot)

    # training-style call (labels provided) -> scalar loss
    intent_labels = jnp.array([1, 3], dtype=jnp.int32)
    slot_labels = jnp.where(attention_mask == 1,
                            jax.random.randint(lkey, (B, S), 0, num_slot,
                                               dtype=jnp.int32),
                            -100)
    loss = model_loss(intent_logits, slot_logits, intent_labels, slot_labels)
    jax.block_until_ready(loss)

    print("KERNEL_OK")
</pallas_src>

<mosaic_0001>
module attributes {stable_mosaic.version = 11 : i64} {
  func.func @_layernorm_kernel(%arg0: i32, %arg1: memref<16x32xbf16, #tpu.memory_space<vmem>>, %arg2: memref<1x32xf32, #tpu.memory_space<vmem>>, %arg3: memref<1x32xf32, #tpu.memory_space<vmem>>, %arg4: memref<16x32xbf16, #tpu.memory_space<vmem>>) attributes {dimension_semantics = [#tpu.dimension_semantics<parallel>], iteration_bounds = array<i64: 1>, scalar_prefetch = 0 : i64, scratch_operands = 0 : i64, tpu.core_type = #tpu.core_type<tc>, window_params = [{transform_indices = @transform_0, window_bounds = array<i64: 16, 32>}, {pipeline_mode = #tpu.pipeline_mode<synchronous>, transform_indices = @transform_1, window_bounds = array<i64: 1, 32>}, {pipeline_mode = #tpu.pipeline_mode<synchronous>, transform_indices = @transform_2, window_bounds = array<i64: 1, 32>}, {transform_indices = @transform_3, window_bounds = array<i64: 16, 32>}]} {
    %c0 = arith.constant 0 : index
    %c0_0 = arith.constant 0 : index
    %0 = vector.load %arg1[%c0, %c0_0] : memref<16x32xbf16, #tpu.memory_space<vmem>>, vector<16x32xbf16>
    %1 = arith.extf %0 : vector<16x32xbf16> to vector<16x32xf32>
    %cst = arith.constant dense<0.000000e+00> : vector<16xf32>
    %2 = vector.multi_reduction <add>, %1, %cst [1] : vector<16x32xf32> to vector<16xf32>
    %3 = vector.shape_cast %2 : vector<16xf32> to vector<16x1xf32>
    %cst_1 = arith.constant 3.200000e+01 : f32
    %4 = vector.broadcast %cst_1 : f32 to vector<16x1xf32>
    %5 = arith.divf %3, %4 : vector<16x1xf32>
    %6 = vector.broadcast %5 : vector<16x1xf32> to vector<16x32xf32>
    %7 = arith.subf %1, %6 : vector<16x32xf32>
    %8 = arith.mulf %7, %7 : vector<16x32xf32>
    %cst_2 = arith.constant dense<0.000000e+00> : vector<16xf32>
    %9 = vector.multi_reduction <add>, %8, %cst_2 [1] : vector<16x32xf32> to vector<16xf32>
    %10 = vector.shape_cast %9 : vector<16xf32> to vector<16x1xf32>
    %cst_3 = arith.constant 3.200000e+01 : f32
    %11 = vector.broadcast %cst_3 : f32 to vector<16x1xf32>
    %12 = arith.divf %10, %11 : vector<16x1xf32>
    %cst_4 = arith.constant 9.99999974E-6 : f32
    %13 = vector.broadcast %cst_4 : f32 to vector<16x1xf32>
    %14 = arith.addf %12, %13 : vector<16x1xf32>
    %15 = math.rsqrt %14 : vector<16x1xf32>
    %16 = vector.broadcast %15 : vector<16x1xf32> to vector<16x32xf32>
    %17 = arith.mulf %7, %16 : vector<16x32xf32>
    %c0_5 = arith.constant 0 : index
    %c0_6 = arith.constant 0 : index
    %18 = vector.load %arg2[%c0_5, %c0_6] : memref<1x32xf32, #tpu.memory_space<vmem>>, vector<1x32xf32>
    %19 = vector.broadcast %18 : vector<1x32xf32> to vector<16x32xf32>
    %20 = arith.mulf %17, %19 : vector<16x32xf32>
    %c0_7 = arith.constant 0 : index
    %c0_8 = arith.constant 0 : index
    %21 = vector.load %arg3[%c0_7, %c0_8] : memref<1x32xf32, #tpu.memory_space<vmem>>, vector<1x32xf32>
    %22 = vector.broadcast %21 : vector<1x32xf32> to vector<16x32xf32>
    %23 = arith.addf %20, %22 : vector<16x32xf32>
    %24 = arith.truncf %23 : vector<16x32xf32> to vector<16x32xbf16>
    %c0_9 = arith.constant 0 : index
    %c0_10 = arith.constant 0 : index
    %25 = vector.load %arg4[%c0_9, %c0_10] : memref<16x32xbf16, #tpu.memory_space<vmem>>, vector<16x32xbf16>
    tpu.vector_store %arg4[%c0_9, %c0_10], %24 {strides = array<i32>} : memref<16x32xbf16, #tpu.memory_space<vmem>>, vector<16x32xbf16>,
    return
  }
  func.func @transform_0(%arg0: i32) -> (i32, i32) {
    %c0_i32 = arith.constant 0 : i32
    %c0_i32_0 = arith.constant 0 : i32
    return %arg0, %c0_i32 : i32, i32
  }
  func.func @transform_1(%arg0: i32) -> (i32, i32) {
    %c0_i32 = arith.constant 0 : i32
    %c0_i32_0 = arith.constant 0 : i32
    %c0_i32_1 = arith.constant 0 : i32
    return %c0_i32, %c0_i32_0 : i32, i32
  }
  func.func @transform_2(%arg0: i32) -> (i32, i32) {
    %c0_i32 = arith.constant 0 : i32
    %c0_i32_0 = arith.constant 0 : i32
    %c0_i32_1 = arith.constant 0 : i32
    return %c0_i32, %c0_i32_0 : i32, i32
  }
  func.func @transform_3(%arg0: i32) -> (i32, i32) {
    %c0_i32 = arith.constant 0 : i32
    %c0_i32_0 = arith.constant 0 : i32
    return %arg0, %c0_i32 : i32, i32
  }
}

</mosaic_0001>

<llo_original>
// kernel: tpu_custom_call.1
$region0: #{tpu_custom_call.1}
  #allocation0 [shape = 'u32[]', space=smem, size = 0x4, offset = 0x4, fixed_abs, tag = 'smem constant byte address 0x4 - core index']
  #allocation1 [shape = 'u32[144,128]{1,0:T(1,128)}', space=vmem, size = 0x12000, scoped, tag = 'internal scratch']
  %s0 = inlined_call_operand.hbm [shape: bf16[16,32], index: 0, kind: input, shape index: {}]
  %s1 = inlined_call_operand.vmem [shape: f32[1,32], index: 1, kind: input, shape index: {}]
  %s2 = inlined_call_operand.vmem [shape: f32[1,32], index: 2, kind: input, shape index: {}]
  %s3 = inlined_call_operand.hbm [shape: bf16[16,32], index: 3, kind: output, shape index: {}]
  %s4 = sld [smem:[#allocation0]]
  $region26: #{tpu_custom_call.1} parent=0
    _
  %s6 = ssub.s32 1, %s4
  %s7 = scalar_select 0, %s6, %s4
  $region1: #{tpu_custom_call.1} parent=0
    #allocation2 [shape = 'u8[4096]{0}', space=vmem, size = 0x1000, scoped, tag = 'input window, operand 0, single buffered']
    #allocation3 [shape = 's32[1]{0}', space=sflag, size = 0x4, scoped, tag = 'scoped memory for tpu_custom_call.1']
    #allocation4 [shape = 's32[1]{0}', space=sflag, size = 0x4, scoped, tag = 'scoped memory for tpu_custom_call.1']
    #allocation5 [shape = 'u8[4096]{0}', space=vmem, size = 0x1000, scoped, tag = 'output window, operand 0, single buffered']
    %8 = vsyncpa [#allocation3], 0
    %9 = vsyncpa [#allocation4], 0
    // Predicated region
    $region2: #{tpu_custom_call.1} parent=1 // pred_check
      _
    $region3: #{tpu_custom_call.1} parent=1 // pred_check_branch
      %11 = sbr.rel (0) target = $region5
    $region4: #{tpu_custom_call.1} parent=1 // pred_region
      %s13 = ssub.s32 128, 128
      %14 = vsyncadd [#allocation3], %s13
      %s15 = sshll.u32 [#allocation2], 4
      %s16 = int_to_ptr.vmem [resolvable:$true] %s15
      %21 = dma.hbm_to_vmem [thread:$0]  %s0, 128, %s16, [#allocation3], 64, 64, 4
    $region5: #{tpu_custom_call.1} parent=1 // pred_fallthru
      _
    // Predicated region
    $region6: #{tpu_custom_call.1} parent=1 // pred_check
      _
    $region7: #{tpu_custom_call.1} parent=1 // pred_check_branch
      %23 = sbr.rel (0) target = $region9
    $region8: #{tpu_custom_call.1} parent=1 // pred_region
      _
    $region9: #{tpu_custom_call.1} parent=1 // pred_fallthru
      _
    // Predicated region
    $region10: #{tpu_custom_call.1} parent=1 // pred_check
      _
    $region11: #{tpu_custom_call.1} parent=1 // pred_check_branch
      %25 = sbr.rel (0) target = $region13
    $region12: #{tpu_custom_call.1} parent=1 // pred_region
      _
    $region13: #{tpu_custom_call.1} parent=1 // pred_fallthru
      _
    // Predicated region
    $region14: #{tpu_custom_call.1} parent=1 // pred_check
      _
    $region15: #{tpu_custom_call.1} parent=1 // pred_check_branch
      %27 = sbr.rel (0) target = $region17
    $region16: #{tpu_custom_call.1} parent=1 // pred_region
      %28 = dma.done [#allocation3], 128
    $region17: #{tpu_custom_call.1} parent=1 // pred_fallthru
      _
    %v29 = vld [vmem:[#allocation2] sm:$0xf]
    %v30 = vld [vmem:[#allocation2 + $0x4] sm:$0xf]
    %v31 = vunpack.c.l.bf16 %v29
    %v32 = vunpack.c.l.bf16 %v30
    %vm33 = vcmask 261120
    %v34 = vsel %vm33, %v31, 0.0
    %35 = vadd.xlane.f32.xlu0 %v34
    %v36 = vpop.xlane.xlu0 %35
    %v37 = vsel %vm33, %v32, 0.0
    %38 = vadd.xlane.f32.xlu0 %v37
    %v39 = vpop.xlane.xlu0 %38
    %v40 = vrcp.pop 32.0
    %v41 = vmul.f32 %v36, %v40
    %v42 = vmul.f32 %v39, %v40
    %v43 = vsub.f32 %v31, %v41
    %v44 = vsub.f32 %v32, %v42
    %v45 = vmul.f32 %v43, %v43
    %v46 = vmul.f32 %v44, %v44
    %v47 = vsel %vm33, %v45, 0.0
    %48 = vadd.xlane.f32.xlu0 %v47
    %v49 = vpop.xlane.xlu0 %48
    %v50 = vsel %vm33, %v46, 0.0
    %51 = vadd.xlane.f32.xlu0 %v50
    %v52 = vpop.xlane.xlu0 %51
    %v53 = vmul.f32 %v49, %v40
    %v54 = vmul.f32 %v52, %v40
    %v55 = vadd.f32 %v53, 1e-05
    %v56 = vadd.f32 %v54, 1e-05
    %v57 = vrsqrt.pop %v55
    %v58 = vrsqrt.pop %v56
    %v59 = vmul.f32 %v43, %v57
    %v60 = vmul.f32 %v44, %v58
    %v61 = vld [vmem:[%s1] sm:$0x1]
    %v63 = vlaneseq
    %v64 = vshrl.u32 %v63, 7
    %v65 = vsub.s32 0, %v64
    %v66 = vrot.slane %v61, %v65
    %v68 = vmul.f32 %v59, %v66
    %v69 = vmul.f32 %v60, %v66
    %v70 = vld [vmem:[%s2] sm:$0x1]
    %v72 = vlaneseq
    %v73 = vshrl.u32 %v72, 7
    %v74 = vsub.s32 0, %v73
    %v75 = vrot.slane %v70, %v74
    %v77 = vadd.f32 %v68, %v75
    %v78 = vadd.f32 %v69, %v75
    %v79 = vpack.c.bf16 %v78, %v77
    %v81 = vunpack.c.l.b16 %v79
    %v82 = vunpack.c.h.b16 %v79
    %v83 = vpack.c.b16 %v81, %v81
    %v84 = vpack.c.b16 %v82, %v82
    %vm87 = vcmask 257024
    %88 = vst.msk [vmem:[#allocation5] sm:$0xf] %vm87, %v83
    %89 = vst.msk [vmem:[#allocation5 + $0x4] sm:$0xf] %vm87, %v84
    // Predicated region
    $region18: #{tpu_custom_call.1} parent=1 // pred_check
      _
    $region19: #{tpu_custom_call.1} parent=1 // pred_check_branch
      %91 = sbr.rel (0) target = $region21
    $region20: #{tpu_custom_call.1} parent=1 // pred_region
      %s93 = ssub.s32 128, 128
      %94 = vsyncadd [#allocation4], %s93
      %s95 = sshll.u32 [#allocation5], 4
      %s96 = int_to_ptr.vmem [resolvable:$true] %s95
      %101 = dma.vmem_to_hbm [thread:$0]  %s96, 128, %s3, [#allocation4], 64, 64, 4
    $region21: #{tpu_custom_call.1} parent=1 // pred_fallthru
      _
    // Predicated region
    $region22: #{tpu_custom_call.1} parent=1 // pred_check
      _
    $region23: #{tpu_custom_call.1} parent=1 // pred_check_branch
      %103 = sbr.rel (0) target = $region25
    $region24: #{tpu_custom_call.1} parent=1 // pred_region
      %104 = dma.done [#allocation4], 128
    $region25: #{tpu_custom_call.1} parent=1 // pred_fallthru
      _
    %105 = vsyncpa [#allocation3], 1
    %106 = vsyncpa [#allocation4], 1

</llo_original>
